<compile_context>
chip_gen: v7x
topology: tpu7x:2x2x1
jax: 0.10.0
libtpu: 0.0.40
codegen_flags: <defaults>
</compile_context>

<pallas_src>
import jax
import jax.numpy as jnp
from jax.experimental import pallas as pl
from jax.experimental.pallas import tpu as pltpu


def _copy_kernel(x_ref, o_ref):
    # Value-identity copy; no arithmetic (the transpose/reshape round trip in
    # the reference forward does not change values).
    o_ref[...] = x_ref[...]


def _sublane_multiple(itemsize):
    # Minimum second-minor tile per dtype packing: f32->8, bf16->16, int8/fp8->32.
    if itemsize >= 4:
        return 8
    if itemsize == 2:
        return 16
    return 32


def _chip_tuning():
    """Return (target_block_bytes, vmem_limit_bytes or None) per TPU generation."""
    try:
        kind = jax.devices()[0].device_kind.lower()
    except Exception:
        kind = ""
    if "v7" in kind:
        # ~3.2 TB/s per-TC HBM: 8 MiB blocks amortize per-grid-step overhead.
        # 4 buffers x 8 MiB = 32 MiB; raise the scoped limit (64 MiB physical).
        return 8 * 1024 * 1024, 48 * 1024 * 1024
    if "v6" in kind:
        # 4 buffers x 4 MiB = 16 MiB fits v6e's 32 MiB default scoped VMEM.
        return 4 * 1024 * 1024, None
    # v5e (16 MiB default scoped VMEM) and unknown chips: 2 MiB blocks.
    return 2 * 1024 * 1024, None


def _pick_cols(total_elems):
    """Largest convenient lane-dense column count (multiple of 128)."""
    for c in (1024, 2048, 4096, 8192, 512, 256, 128):
        if total_elems % c == 0:
            return c
    return None


def resblock3d_forward(x, materialize=True):
    """ResBlock3D.forward: (N, F, C, H, W) -> (N, F, C, H, W), values == x.

    The reference forward is an exact identity (self.conv is never applied).
    materialize=False returns x at zero cost; materialize=True runs a single
    lane-dense, chip-tuned Pallas copy kernel.
    """
    if not materialize:
        return x  # zero-cost path: the forward is a value identity

    total = int(x.size)
    itemsize = x.dtype.itemsize
    sublane = _sublane_multiple(itemsize)
    target_block_bytes, vmem_limit = _chip_tuning()

    cp_kwargs = dict(dimension_semantics=("parallel",))
    if vmem_limit is not None:
        cp_kwargs["vmem_limit_bytes"] = vmem_limit
    compiler_params = pltpu.CompilerParams(**cp_kwargs)
    # Pure mem-bound copy: read + write the whole array once.
    cost = pl.CostEstimate(flops=0, transcendentals=0,
                           bytes_accessed=2 * total * itemsize)

    cols = _pick_cols(total)
    if cols is not None:
        rows = total // cols
        block_rows = (target_block_bytes // (cols * itemsize)) // sublane * sublane
        block_rows = max(sublane, block_rows)
        block_rows = min(block_rows, rows)  # == rows (full extent) is legal
        flat = x.reshape(rows, cols)
        spec = pl.BlockSpec((block_rows, cols), lambda i: (i, 0))
        out = pl.pallas_call(
            _copy_kernel,
            out_shape=jax.ShapeDtypeStruct((rows, cols), x.dtype),
            grid=(pl.cdiv(rows, block_rows),),  # ragged last block is masked
            in_specs=[spec],
            out_specs=spec,
            compiler_params=compiler_params,
            cost_estimate=cost,
        )(flat)
        return out.reshape(x.shape)

    # Element count has no multiple-of-128 factorization: chunked 1-D copy with
    # fixed-size blocks and a masked ragged tail (never stages the whole array
    # in VMEM).
    block_elems = max(1024, (target_block_bytes // itemsize) // 1024 * 1024)
    block_elems = min(block_elems, total)  # == total (full extent) is legal
    flat = x.reshape(total)
    spec = pl.BlockSpec((block_elems,), lambda i: (i,))
    out = pl.pallas_call(
        _copy_kernel,
        out_shape=jax.ShapeDtypeStruct((total,), x.dtype),
        grid=(pl.cdiv(total, block_elems),),
        in_specs=[spec],
        out_specs=spec,
        compiler_params=compiler_params,
        cost_estimate=cost,
    )(flat)
    return out.reshape(x.shape)


def init_resblock3d_params(key, channels, n_feats):
    """Deterministic init of the (unused-in-forward) conv parameters.

    Matches nn.Conv2d(n_feats, n_feats, 3, padding=1) x 2 shapes.  The
    reference forward never applies self.conv, so these do not participate in
    the kernel; provided only for module-shape completeness.
    """
    # TODO(synk): self.conv (Conv2d->ReLU->Conv2d) is dead code in the reference
    # forward, so it is intentionally not implemented as a Pallas kernel.
    k1, k2, k3, k4 = jax.random.split(key, 4)
    fan_in = n_feats * 3 * 3
    bound = 1.0 / jnp.sqrt(fan_in)
    return {
        "conv0_w": jax.random.uniform(k1, (n_feats, n_feats, 3, 3), jnp.float32, -bound, bound),
        "conv0_b": jax.random.uniform(k2, (n_feats,), jnp.float32, -bound, bound),
        "conv1_w": jax.random.uniform(k3, (n_feats, n_feats, 3, 3), jnp.float32, -bound, bound),
        "conv1_b": jax.random.uniform(k4, (n_feats,), jnp.float32, -bound, bound),
    }


if __name__ == "__main__":
    # Small shapes consistent with the module: x is 5-D (N, F, C, H, W)
    # where F == n_feats (conv channel dim) and C == self.channels.
    N, F, C, H, W = 2, 4, 4, 16, 16
    channels, n_feats = C, F

    key = jax.random.PRNGKey(0)
    kx, kp = jax.random.split(key)
    x = jax.random.normal(kx, (N, F, C, H, W), dtype=jnp.float32)

    _ = init_resblock3d_params(kp, channels, n_feats)  # unused in forward (see note)

    out = jax.block_until_ready(resblock3d_forward(x))
    assert out.shape == x.shape and out.dtype == x.dtype
    assert bool(jnp.array_equal(out, x))

    # bf16 path (sublane multiple 16) -- still an exact identity.
    xb = jax.random.normal(kx, (1, 3, 5, 16, 128), dtype=jnp.bfloat16)
    outb = jax.block_until_ready(resblock3d_forward(xb))
    assert outb.shape == xb.shape and outb.dtype == xb.dtype
    assert bool(jnp.array_equal(outb, xb))

    # Awkward row count (may produce a ragged, masked last grid block).
    xr = jax.random.normal(kp, (2, 4, 4, 128, 160), dtype=jnp.float32)
    outr = jax.block_until_ready(resblock3d_forward(xr))
    assert bool(jnp.array_equal(outr, xr))

    # Element count with no multiple-of-128 factorization -> 1-D chunked path.
    xo = jax.random.normal(kp, (1, 1, 3, 5, 7), dtype=jnp.float32)
    outo = jax.block_until_ready(resblock3d_forward(xo))
    assert bool(jnp.array_equal(outo, xo))

    # Zero-cost path sanity check.
    assert resblock3d_forward(x, materialize=False) is x

    print("KERNEL_OK")
</pallas_src>

<mosaic_0001>
module attributes {stable_mosaic.version = 11 : i64} {
  func.func @_copy_kernel(%arg0: i32, %arg1: memref<8x1024xf32, #tpu.memory_space<vmem>>, %arg2: memref<8x1024xf32, #tpu.memory_space<vmem>>) attributes {dimension_semantics = [#tpu.dimension_semantics<parallel>], iteration_bounds = array<i64: 1>, scalar_prefetch = 0 : i64, scratch_operands = 0 : i64, tpu.core_type = #tpu.core_type<tc>, window_params = [{transform_indices = @transform_0, window_bounds = array<i64: 8, 1024>}, {transform_indices = @transform_1, window_bounds = array<i64: 8, 1024>}]} {
    %c0 = arith.constant 0 : index
    %c0_0 = arith.constant 0 : index
    %0 = vector.load %arg1[%c0, %c0_0] : memref<8x1024xf32, #tpu.memory_space<vmem>>, vector<8x1024xf32>
    %c0_1 = arith.constant 0 : index
    %c0_2 = arith.constant 0 : index
    %1 = vector.load %arg2[%c0_1, %c0_2] : memref<8x1024xf32, #tpu.memory_space<vmem>>, vector<8x1024xf32>
    tpu.vector_store %arg2[%c0_1, %c0_2], %0 {strides = array<i32>} : memref<8x1024xf32, #tpu.memory_space<vmem>>, vector<8x1024xf32>,
    return
  }
  func.func @transform_0(%arg0: i32) -> (i32, i32) {
    %c0_i32 = arith.constant 0 : i32
    %c0_i32_0 = arith.constant 0 : i32
    return %arg0, %c0_i32 : i32, i32
  }
  func.func @transform_1(%arg0: i32) -> (i32, i32) {
    %c0_i32 = arith.constant 0 : i32
    %c0_i32_0 = arith.constant 0 : i32
    return %arg0, %c0_i32 : i32, i32
  }
}

</mosaic_0001>

<llo_original>
// kernel: tpu_custom_call.1
$region0: #{tpu_custom_call.1}
  #allocation0 [shape = 'u32[]', space=smem, size = 0x4, offset = 0x4, fixed_abs, tag = 'smem constant byte address 0x4 - core index']
  #allocation1 [shape = 'u32[144,128]{1,0:T(1,128)}', space=vmem, size = 0x12000, scoped, tag = 'internal scratch']
  %s0 = inlined_call_operand.hbm [shape: f32[8,1024], index: 0, kind: input, shape index: {}]
  %s1 = inlined_call_operand.hbm [shape: f32[8,1024], index: 1, kind: output, shape index: {}]
  %s2 = sld [smem:[#allocation0]]
  $region18: #{tpu_custom_call.1} parent=0
    _
  %s4 = ssub.s32 1, %s2
  %s5 = scalar_select 0, %s4, %s2
  $region1: #{tpu_custom_call.1} parent=0
    #allocation2 [shape = 'u8[32768]{0}', space=vmem, size = 0x8000, scoped, tag = 'input window, operand 0, single buffered']
    #allocation3 [shape = 's32[1]{0}', space=sflag, size = 0x4, scoped, tag = 'scoped memory for tpu_custom_call.1']
    #allocation4 [shape = 's32[1]{0}', space=sflag, size = 0x4, scoped, tag = 'scoped memory for tpu_custom_call.1']
    #allocation5 [shape = 'u8[32768]{0}', space=vmem, size = 0x8000, scoped, tag = 'output window, operand 0, single buffered']
    %6 = vsyncpa [#allocation3], 0
    %7 = vsyncpa [#allocation4], 0
    // Predicated region
    $region2: #{tpu_custom_call.1} parent=1 // pred_check
      _
    $region3: #{tpu_custom_call.1} parent=1 // pred_check_branch
      %9 = sbr.rel (0) target = $region5
    $region4: #{tpu_custom_call.1} parent=1 // pred_region
      %s11 = ssub.s32 1024, 1024
      %12 = vsyncadd [#allocation3], %s11
      %s14 = sshll.u32 [#allocation2], 4
      %s15 = int_to_ptr.vmem [resolvable:$true] %s14
      %17 = dma.hbm_to_vmem [thread:$0]  %s0, 1024, %s15, [#allocation3]
    $region5: #{tpu_custom_call.1} parent=1 // pred_fallthru
      _
    // Predicated region
    $region6: #{tpu_custom_call.1} parent=1 // pred_check
      _
    $region7: #{tpu_custom_call.1} parent=1 // pred_check_branch
      %19 = sbr.rel (0) target = $region9
    $region8: #{tpu_custom_call.1} parent=1 // pred_region
      %20 = dma.done [#allocation3], 1024
    $region9: #{tpu_custom_call.1} parent=1 // pred_fallthru
      _
    %v21 = vld [vmem:[#allocation2] sm:$0xff]
    %v22 = vld [vmem:[#allocation2 + $0x8] sm:$0xff]
    %v23 = vld [vmem:[#allocation2 + $0x10] sm:$0xff]
    %v24 = vld [vmem:[#allocation2 + $0x18] sm:$0xff]
    %v25 = vld [vmem:[#allocation2 + $0x20] sm:$0xff]
    %v26 = vld [vmem:[#allocation2 + $0x28] sm:$0xff]
    %v27 = vld [vmem:[#allocation2 + $0x30] sm:$0xff]
    %v28 = vld [vmem:[#allocation2 + $0x38] sm:$0xff]
    %29 = vst [vmem:[#allocation5] sm:$0xff] %v21
    %30 = vst [vmem:[#allocation5 + $0x8] sm:$0xff] %v22
    %31 = vst [vmem:[#allocation5 + $0x10] sm:$0xff] %v23
    %32 = vst [vmem:[#allocation5 + $0x18] sm:$0xff] %v24
    %33 = vst [vmem:[#allocation5 + $0x20] sm:$0xff] %v25
    %34 = vst [vmem:[#allocation5 + $0x28] sm:$0xff] %v26
    %35 = vst [vmem:[#allocation5 + $0x30] sm:$0xff] %v27
    %36 = vst [vmem:[#allocation5 + $0x38] sm:$0xff] %v28
    // Predicated region
    $region10: #{tpu_custom_call.1} parent=1 // pred_check
      _
    $region11: #{tpu_custom_call.1} parent=1 // pred_check_branch
      %38 = sbr.rel (0) target = $region13
    $region12: #{tpu_custom_call.1} parent=1 // pred_region
      %s40 = ssub.s32 1024, 1024
      %41 = vsyncadd [#allocation4], %s40
      %s43 = sshll.u32 [#allocation5], 4
      %s44 = int_to_ptr.vmem [resolvable:$true] %s43
      %46 = dma.vmem_to_hbm [thread:$0]  %s44, 1024, %s1, [#allocation4]
    $region13: #{tpu_custom_call.1} parent=1 // pred_fallthru
      _
    // Predicated region
    $region14: #{tpu_custom_call.1} parent=1 // pred_check
      _
    $region15: #{tpu_custom_call.1} parent=1 // pred_check_branch
      %48 = sbr.rel (0) target = $region17
    $region16: #{tpu_custom_call.1} parent=1 // pred_region
      %49 = dma.done [#allocation4], 1024
    $region17: #{tpu_custom_call.1} parent=1 // pred_fallthru
      _
    %50 = vsyncpa [#allocation3], 1
    %51 = vsyncpa [#allocation4], 1

</llo_original>
